<compile_context>
chip_gen: v7x
topology: tpu7x:2x2x1
jax: 0.10.0
libtpu: 0.0.40
codegen_flags: <defaults>
</compile_context>

<pallas_src>
import functools

import jax
import jax.numpy as jnp
from jax.experimental import pallas as pl
from jax.experimental.pallas import tpu as pltpu


def _round_up(x, m):
    return ((x + m - 1) // m) * m


def _focal_pow(w, gamma):
    """(1 - pt) ** gamma with integer gamma specialized to VALU multiplies."""
    if float(gamma) == int(gamma) and 0 <= int(gamma) <= 8:
        g = int(gamma)
        if g == 0:
            return jnp.ones_like(w)
        out = w
        for _ in range(g - 1):
            out = out * w
        return out
    # General (non-integer) gamma: pow on clamped w >= 0 (EUP log+exp path).
    return w ** gamma


def _focal_loss_kernel(logits_ref, targets_ref, alpha_ref, out_ref, *,
                       gamma, n_valid):
    i = pl.program_id(0)

    logits = logits_ref[...].astype(jnp.float32)   # (C, 8, L) packed, dense vregs
    tgt = targets_ref[...]                         # (8, L) int32
    c, _, tile_l = logits.shape

    # --- per-sample cross entropy; the class reduction runs over the leading
    #     (untiled) axis, so every per-sample intermediate is a dense (8, L) slab.
    m = jnp.max(logits, axis=0)                            # (8, L)
    exp_shift = jnp.exp(logits - m[None])                  # (C, 8, L)  EUP exp
    sumexp = jnp.sum(exp_shift, axis=0)                    # (8, L)

    cls = jax.lax.broadcasted_iota(jnp.int32, logits.shape, 0)
    onehot = (cls == tgt[None]).astype(jnp.float32)        # (C, 8, L)

    logit_t = jnp.sum(onehot * logits, axis=0)             # (8, L)
    exp_t = jnp.sum(onehot * exp_shift, axis=0)            # (8, L)

    ce = m + jnp.log(sumexp) - logit_t                     # (8, L)     EUP log

    # pt from the already-computed exponentials (no second EUP exp);
    # exp_t <= sumexp so pt <= 1 up to rounding (clamped below).
    pt = exp_t / sumexp                                    # (8, L)

    # --- alpha gather: tiny per-class scalars read from SMEM ---
    alpha_t = onehot[0] * alpha_ref[0]
    for cc in range(1, c):
        alpha_t = alpha_t + onehot[cc] * alpha_ref[cc]

    # --- focal weighting ---
    w = jnp.maximum(1.0 - pt, 0.0)                         # clamp rounding
    focal = alpha_t * _focal_pow(w, gamma) * ce            # (8, L)

    # --- mask padded samples: packed sample index = (i*L + lane)*8 + sublane ---
    s_idx = jax.lax.broadcasted_iota(jnp.int32, focal.shape, 0)
    l_idx = jax.lax.broadcasted_iota(jnp.int32, focal.shape, 1)
    gidx = (i * tile_l + l_idx) * 8 + s_idx
    focal = jnp.where(gidx < n_valid, focal, 0.0)

    # --- fold lanes into one dense (8, 128) partial; several independent
    #     accumulators break the serial VALU dependency chain.
    n_chunks = tile_l // 128
    n_acc = min(8, n_chunks)
    accs = [focal[:, k * 128:(k + 1) * 128] for k in range(n_acc)]
    for k in range(n_acc, n_chunks):
        accs[k % n_acc] = accs[k % n_acc] + focal[:, k * 128:(k + 1) * 128]
    acc = accs[0]
    for a in accs[1:]:
        acc = acc + a

    out_ref[...] = acc[None]                               # dense (1, 8, 128) store


def focal_loss_pallas(logits, targets, alpha=None, gamma=2.0,
                      reduction="mean", tile_n=None):
    """Focal loss forward. logits: [N, C], targets: [N] int, alpha: [C]/scalar/None."""
    n, c = logits.shape

    n1024 = _round_up(max(n, 1), 1024)
    if tile_n is None:
        # Per-block VMEM ceiling: keep the f32 logits block around 0.5-2 MiB so
        # double-buffered inputs stay well under every scoped-VMEM default
        # (v7x: 32 MiB of 64 MiB physical is the tightest).
        budget = 2 * 1024 * 1024
        by_vmem = max(1024, (budget // max(1, c * logits.dtype.itemsize)) // 1024 * 1024)
        # Prefer >= 2 grid steps whenever possible so the "parallel" axis can be
        # split across v7x's two TensorCores.
        two_way = max(1024, _round_up((n1024 + 1) // 2, 1024))
        tile_n = min(65536, by_vmem, two_way)
    assert tile_n % 1024 == 0 and tile_n >= 1024

    n_pad = _round_up(n, tile_n)
    num_tiles = n_pad // tile_n
    lanes = n_pad // 8          # packed lane extent (sample j -> sublane j%8, lane j//8)
    tile_l = tile_n // 8

    # Layout plumbing: one XLA pad+transpose copy producing the packed
    # (C, 8, N/8) layout.  Native dtype kept; f32 upcast happens in-kernel.
    # TODO(synk): ideally fuse this relayout into the producer of `logits`
    # (or consume [N, C] directly once a cheap in-kernel small-minor transpose
    # is available) -- on HBM-bound v5e this is the remaining extra read+write
    # of the logits stream.
    logits_p = jnp.pad(logits, ((0, n_pad - n), (0, 0)))
    logits_p = jnp.transpose(logits_p.reshape(lanes, 8, c), (2, 1, 0))    # (C, 8, lanes)
    targets_p = jnp.pad(targets.astype(jnp.int32), (0, n_pad - n))
    targets_p = jnp.transpose(targets_p.reshape(lanes, 8), (1, 0))        # (8, lanes)
    # TODO(synk): targets could be narrowed to int8/int16 during this relayout
    # to shrink their HBM stream 2-4x.

    if alpha is None:
        alpha_c = jnp.ones((c,), dtype=jnp.float32)
    else:
        a = jnp.asarray(alpha, dtype=jnp.float32)
        if a.ndim == 0:
            a = jnp.full((c,), a, dtype=jnp.float32)
        alpha_c = a.reshape(c)

    kernel = functools.partial(_focal_loss_kernel, gamma=gamma, n_valid=n)

    partials = pl.pallas_call(
        kernel,
        out_shape=jax.ShapeDtypeStruct((num_tiles, 8, 128), jnp.float32),
        grid=(num_tiles,),
        in_specs=[
            pl.BlockSpec((c, 8, tile_l), lambda i: (0, 0, i)),     # logits, streamed
            pl.BlockSpec((8, tile_l), lambda i: (0, i)),           # targets, streamed
            pl.BlockSpec(memory_space=pltpu.MemorySpace.SMEM),     # alpha scalars
        ],
        out_specs=pl.BlockSpec((1, 8, 128), lambda i: (i, 0, 0)),
        compiler_params=pltpu.CompilerParams(
            dimension_semantics=("parallel",)),
    )(logits_p, targets_p, alpha_c)

    total = jnp.sum(partials)
    if reduction == "mean":
        return total / jnp.float32(n)
    if reduction == "sum":
        return total
    # TODO(synk): reduction='none' (per-sample vector) is not wired through the
    # fused kernel; only 'mean' (module default) and 'sum' are implemented.
    raise NotImplementedError("reduction='none' is not implemented")


def focal_loss_ref(logits, targets, alpha=None, gamma=2.0):
    """Pure-JAX reference mirroring the PyTorch FocalLoss module (mean)."""
    logits = logits.astype(jnp.float32)
    lse = jax.nn.logsumexp(logits, axis=-1)
    logit_t = jnp.take_along_axis(logits, targets[:, None], axis=-1)[:, 0]
    ce = lse - logit_t
    pt = jnp.exp(-ce)
    w = (1.0 - pt) ** gamma
    if alpha is not None:
        alpha_t = jnp.asarray(alpha, jnp.float32)[targets]
        return jnp.mean(alpha_t * w * ce)
    return jnp.mean(w * ce)


if __name__ == "__main__":
    key = jax.random.PRNGKey(0)
    k1, k2 = jax.random.split(key)

    # Module default num_classes=6; N chosen so the auto tile heuristic yields a
    # 2-tile grid (v7x megacore path) with a masked, mostly-padded last tile.
    N, C = 2500, 6
    gamma = 2.0

    logits = jax.random.normal(k1, (N, C), dtype=jnp.float32)
    targets = jax.random.randint(k2, (N,), 0, C, dtype=jnp.int32)
    alpha = jnp.array([0.5, 0.75, 1.0, 1.25, 1.5, 1.75], dtype=jnp.float32)

    loss = focal_loss_pallas(logits, targets, alpha, gamma=gamma)
    jax.block_until_ready(loss)
    ref = focal_loss_ref(logits, targets, alpha, gamma=gamma)
    assert jnp.allclose(loss, ref, rtol=1e-4, atol=1e-5), (loss, ref)

    # alpha=None branch of the module (alpha_t == 1), small single-tile N with
    # an explicit tile size, exercising the in-tile padding mask.
    N2 = 200
    loss_na = focal_loss_pallas(logits[:N2], targets[:N2], None,
                                gamma=gamma, tile_n=1024)
    jax.block_until_ready(loss_na)
    ref_na = focal_loss_ref(logits[:N2], targets[:N2], None, gamma=gamma)
    assert jnp.allclose(loss_na, ref_na, rtol=1e-4, atol=1e-5), (loss_na, ref_na)

    print("KERNEL_OK")
</pallas_src>

<mosaic_0001>
module attributes {stable_mosaic.version = 11 : i64} {
  func.func @_focal_loss_kernel(%arg0: i32, %arg1: memref<6x8x256xf32, #tpu.memory_space<vmem>>, %arg2: memref<8x256xi32, #tpu.memory_space<vmem>>, %arg3: memref<6xf32, #tpu.memory_space<smem>>, %arg4: memref<1x8x128xf32, #tpu.memory_space<vmem>>) attributes {dimension_semantics = [#tpu.dimension_semantics<parallel>], iteration_bounds = array<i64: 2>, scalar_prefetch = 0 : i64, scratch_operands = 0 : i64, tpu.core_type = #tpu.core_type<tc>, window_params = [{transform_indices = @transform_0, window_bounds = array<i64: 6, 8, 256>}, {transform_indices = @transform_1, window_bounds = array<i64: 8, 256>}, {transform_indices = @transform_2, window_bounds = array<i64: 6>}, {transform_indices = @transform_3, window_bounds = array<i64: 1, 8, 128>}]} {
    %c0 = arith.constant 0 : index
    %c0_0 = arith.constant 0 : index
    %c0_1 = arith.constant 0 : index
    %0 = vector.load %arg1[%c0, %c0_0, %c0_1] : memref<6x8x256xf32, #tpu.memory_space<vmem>>, vector<6x8x256xf32>
    %c0_2 = arith.constant 0 : index
    %c0_3 = arith.constant 0 : index
    %1 = vector.load %arg2[%c0_2, %c0_3] : memref<8x256xi32, #tpu.memory_space<vmem>>, vector<8x256xi32>
    %cst = arith.constant dense<0xFF800000> : vector<8x256xf32>
    %2 = vector.multi_reduction <maximumf>, %0, %cst [0] : vector<6x8x256xf32> to vector<8x256xf32>
    %3 = vector.shape_cast %2 : vector<8x256xf32> to vector<1x8x256xf32>
    %4 = vector.broadcast %3 : vector<1x8x256xf32> to vector<6x8x256xf32>
    %5 = arith.subf %0, %4 : vector<6x8x256xf32>
    %6 = math.exp %5 : vector<6x8x256xf32>
    %cst_4 = arith.constant dense<0.000000e+00> : vector<8x256xf32>
    %7 = vector.multi_reduction <add>, %6, %cst_4 [0] : vector<6x8x256xf32> to vector<8x256xf32>
    %8 = tpu.iota {dimensions = array<i32: 0>} : vector<6x8x256xi32>
    %9 = vector.shape_cast %1 : vector<8x256xi32> to vector<1x8x256xi32>
    %10 = vector.broadcast %9 : vector<1x8x256xi32> to vector<6x8x256xi32>
    %11 = arith.cmpi eq, %8, %10 : vector<6x8x256xi32>
    %12 = arith.extui %11 : vector<6x8x256xi1> to vector<6x8x256xi32>
    %13 = arith.sitofp %12 : vector<6x8x256xi32> to vector<6x8x256xf32>
    %14 = arith.mulf %13, %0 : vector<6x8x256xf32>
    %cst_5 = arith.constant dense<0.000000e+00> : vector<8x256xf32>
    %15 = vector.multi_reduction <add>, %14, %cst_5 [0] : vector<6x8x256xf32> to vector<8x256xf32>
    %16 = arith.mulf %13, %6 : vector<6x8x256xf32>
    %cst_6 = arith.constant dense<0.000000e+00> : vector<8x256xf32>
    %17 = vector.multi_reduction <add>, %16, %cst_6 [0] : vector<6x8x256xf32> to vector<8x256xf32>
    %18 = math.log %7 : vector<8x256xf32>
    %19 = arith.addf %2, %18 : vector<8x256xf32>
    %20 = arith.subf %19, %15 : vector<8x256xf32>
    %21 = arith.divf %17, %7 : vector<8x256xf32>
    %22 = vector.extract_strided_slice %13 {offsets = [0, 0, 0], sizes = [1, 8, 256], strides = [1, 1, 1]} : vector<6x8x256xf32> to vector<1x8x256xf32>
    %23 = vector.shape_cast %22 : vector<1x8x256xf32> to vector<8x256xf32>
    %c0_7 = arith.constant 0 : index
    %24 = memref.load %arg3[%c0_7] : memref<6xf32, #tpu.memory_space<smem>>
    %25 = vector.broadcast %24 : f32 to vector<8x256xf32>
    %26 = arith.mulf %23, %25 : vector<8x256xf32>
    %27 = vector.extract_strided_slice %13 {offsets = [1, 0, 0], sizes = [1, 8, 256], strides = [1, 1, 1]} : vector<6x8x256xf32> to vector<1x8x256xf32>
    %28 = vector.shape_cast %27 : vector<1x8x256xf32> to vector<8x256xf32>
    %c1 = arith.constant 1 : index
    %29 = memref.load %arg3[%c1] : memref<6xf32, #tpu.memory_space<smem>>
    %30 = vector.broadcast %29 : f32 to vector<8x256xf32>
    %31 = arith.mulf %28, %30 : vector<8x256xf32>
    %32 = arith.addf %26, %31 : vector<8x256xf32>
    %33 = vector.extract_strided_slice %13 {offsets = [2, 0, 0], sizes = [1, 8, 256], strides = [1, 1, 1]} : vector<6x8x256xf32> to vector<1x8x256xf32>
    %34 = vector.shape_cast %33 : vector<1x8x256xf32> to vector<8x256xf32>
    %c2 = arith.constant 2 : index
    %35 = memref.load %arg3[%c2] : memref<6xf32, #tpu.memory_space<smem>>
    %36 = vector.broadcast %35 : f32 to vector<8x256xf32>
    %37 = arith.mulf %34, %36 : vector<8x256xf32>
    %38 = arith.addf %32, %37 : vector<8x256xf32>
    %39 = vector.extract_strided_slice %13 {offsets = [3, 0, 0], sizes = [1, 8, 256], strides = [1, 1, 1]} : vector<6x8x256xf32> to vector<1x8x256xf32>
    %40 = vector.shape_cast %39 : vector<1x8x256xf32> to vector<8x256xf32>
    %c3 = arith.constant 3 : index
    %41 = memref.load %arg3[%c3] : memref<6xf32, #tpu.memory_space<smem>>
    %42 = vector.broadcast %41 : f32 to vector<8x256xf32>
    %43 = arith.mulf %40, %42 : vector<8x256xf32>
    %44 = arith.addf %38, %43 : vector<8x256xf32>
    %45 = vector.extract_strided_slice %13 {offsets = [4, 0, 0], sizes = [1, 8, 256], strides = [1, 1, 1]} : vector<6x8x256xf32> to vector<1x8x256xf32>
    %46 = vector.shape_cast %45 : vector<1x8x256xf32> to vector<8x256xf32>
    %c4 = arith.constant 4 : index
    %47 = memref.load %arg3[%c4] : memref<6xf32, #tpu.memory_space<smem>>
    %48 = vector.broadcast %47 : f32 to vector<8x256xf32>
    %49 = arith.mulf %46, %48 : vector<8x256xf32>
    %50 = arith.addf %44, %49 : vector<8x256xf32>
    %51 = vector.extract_strided_slice %13 {offsets = [5, 0, 0], sizes = [1, 8, 256], strides = [1, 1, 1]} : vector<6x8x256xf32> to vector<1x8x256xf32>
    %52 = vector.shape_cast %51 : vector<1x8x256xf32> to vector<8x256xf32>
    %c5 = arith.constant 5 : index
    %53 = memref.load %arg3[%c5] : memref<6xf32, #tpu.memory_space<smem>>
    %54 = vector.broadcast %53 : f32 to vector<8x256xf32>
    %55 = arith.mulf %52, %54 : vector<8x256xf32>
    %56 = arith.addf %50, %55 : vector<8x256xf32>
    %cst_8 = arith.constant 1.000000e+00 : f32
    %57 = vector.broadcast %cst_8 : f32 to vector<8x256xf32>
    %58 = arith.subf %57, %21 : vector<8x256xf32>
    %cst_9 = arith.constant 0.000000e+00 : f32
    %59 = vector.broadcast %cst_9 : f32 to vector<8x256xf32>
    %60 = arith.maximumf %58, %59 : vector<8x256xf32>
    %61 = arith.mulf %60, %60 : vector<8x256xf32>
    %62 = arith.mulf %56, %61 : vector<8x256xf32>
    %63 = arith.mulf %62, %20 : vector<8x256xf32>
    %64 = tpu.iota {dimensions = array<i32: 0>} : vector<8x256xi32>
    %65 = tpu.iota {dimensions = array<i32: 1>} : vector<8x256xi32>
    %c256_i32 = arith.constant 256 : i32
    %66 = arith.muli %arg0, %c256_i32 : i32
    %67 = vector.broadcast %66 : i32 to vector<8x256xi32>
    %68 = arith.addi %67, %65 : vector<8x256xi32>
    %c8_i32 = arith.constant 8 : i32
    %69 = vector.broadcast %c8_i32 : i32 to vector<8x256xi32>
    %70 = arith.muli %68, %69 : vector<8x256xi32>
    %71 = arith.addi %70, %64 : vector<8x256xi32>
    %c2500_i32 = arith.constant 2500 : i32
    %72 = vector.broadcast %c2500_i32 : i32 to vector<8x256xi32>
    %73 = arith.cmpi slt, %71, %72 : vector<8x256xi32>
    %cst_10 = arith.constant 0.000000e+00 : f32
    %74 = vector.broadcast %cst_10 : f32 to vector<8x256xf32>
    %75 = arith.select %73, %63, %74 : vector<8x256xi1>, vector<8x256xf32>
    %76 = vector.extract_strided_slice %75 {offsets = [0, 0], sizes = [8, 128], strides = [1, 1]} : vector<8x256xf32> to vector<8x128xf32>
    %77 = vector.extract_strided_slice %75 {offsets = [0, 128], sizes = [8, 128], strides = [1, 1]} : vector<8x256xf32> to vector<8x128xf32>
    %78 = arith.addf %76, %77 : vector<8x128xf32>
    %79 = vector.shape_cast %78 : vector<8x128xf32> to vector<1x8x128xf32>
    %c0_11 = arith.constant 0 : index
    %c0_12 = arith.constant 0 : index
    %c0_13 = arith.constant 0 : index
    %80 = vector.load %arg4[%c0_11, %c0_12, %c0_13] : memref<1x8x128xf32, #tpu.memory_space<vmem>>, vector<1x8x128xf32>
    tpu.vector_store %arg4[%c0_11, %c0_12, %c0_13], %79 {strides = array<i32>} : memref<1x8x128xf32, #tpu.memory_space<vmem>>, vector<1x8x128xf32>,
    return
  }
  func.func @transform_0(%arg0: i32) -> (i32, i32, i32) {
    %c0_i32 = arith.constant 0 : i32
    %c0_i32_0 = arith.constant 0 : i32
    %c0_i32_1 = arith.constant 0 : i32
    return %c0_i32, %c0_i32_0, %arg0 : i32, i32, i32
  }
  func.func @transform_1(%arg0: i32) -> (i32, i32) {
    %c0_i32 = arith.constant 0 : i32
    %c0_i32_0 = arith.constant 0 : i32
    return %c0_i32, %arg0 : i32, i32
  }
  func.func @transform_2(%arg0: i32) -> i32 {
    %c0_i32 = arith.constant 0 : i32
    %c0_i32_0 = arith.constant 0 : i32
    return %c0_i32 : i32
  }
  func.func @transform_3(%arg0: i32) -> (i32, i32, i32) {
    %c0_i32 = arith.constant 0 : i32
    %c0_i32_0 = arith.constant 0 : i32
    %c0_i32_1 = arith.constant 0 : i32
    return %arg0, %c0_i32, %c0_i32_0 : i32, i32, i32
  }
}

</mosaic_0001>

<llo_original>
// kernel: tpu_custom_call.1
$region0: #{tpu_custom_call.1}
  #allocation0 [shape = 'u32[]', space=smem, size = 0x4, offset = 0x4, fixed_abs, tag = 'smem constant byte address 0x4 - core index']
  #allocation1 [shape = 'u32[144,128]{1,0:T(1,128)}', space=vmem, size = 0x12000, scoped, tag = 'internal scratch']
  %s0 = inlined_call_operand.hbm [shape: f32[6,8,512], index: 0, kind: input, shape index: {}]
  %s1 = inlined_call_operand.hbm [shape: s32[8,512], index: 1, kind: input, shape index: {}]
  %s2 = inlined_call_operand.vmem [shape: f32[6], index: 2, kind: input, shape index: {}]
  %s3 = inlined_call_operand.hbm [shape: f32[2,8,128], index: 3, kind: output, shape index: {}]
  %s4 = sld [smem:[#allocation0]]
  $region57: #{tpu_custom_call.1} parent=0
    _
  %s6 = ssub.s32 1, %s4
  %s7 = scalar_select 0, %s6, %s4
  $region1: #{tpu_custom_call.1} parent=0
    #allocation2 [shape = 'u8[98304]{0}', space=vmem, size = 0x18000, scoped, tag = 'input window, operand 0']
    #allocation3 [shape = 's32[2]{0}', space=sflag, size = 0x8, scoped, tag = 'scoped memory for tpu_custom_call.1']
    #allocation4 [shape = 's32[2]{0}', space=sflag, size = 0x8, scoped, tag = 'scoped memory for tpu_custom_call.1']
    #allocation5 [shape = 's32[2]{0}', space=sflag, size = 0x8, scoped, tag = 'scoped memory for tpu_custom_call.1']
    #allocation6 [shape = 'u8[16384]{0}', space=vmem, size = 0x4000, scoped, tag = 'input window, operand 1']
    #allocation7 [shape = 's32[2]{0}', space=sflag, size = 0x8, scoped, tag = 'scoped memory for tpu_custom_call.1']
    #allocation8 [shape = 'u8[512]{0}', space=smem, size = 0x200, scoped, tag = 'input window, operand 2, single buffered']
    #allocation9 [shape = 'u8[8192]{0}', space=vmem, size = 0x2000, scoped, tag = 'output window, operand 0']
    %8 = vsyncpa [#allocation3], 0
    %s9 = scalar_lea.sflag [#allocation3], 1
    %10 = vsyncpa %s9, 0
    %11 = vsyncpa [#allocation7], 0
    %s12 = scalar_lea.sflag [#allocation7], 1
    %13 = vsyncpa %s12, 0
    %14 = vsyncpa [#allocation5], 0
    %15 = vsyncpa [#allocation4], 0
    %s16 = scalar_lea.sflag [#allocation4], 1
    %17 = vsyncpa %s16, 0
    loop: start=0, step=1, limit=4
    $region2: #{tpu_custom_call.1} parent=1 // loop_pre_header
      _
    $region3: #{tpu_custom_call.1} parent=1 // loop_header
      %s19 = sphi 0, %s23
      %p20 = scmp.ge.s32.totalorder %s19, 4
      %s29 = sphi 0, %s31
      %s32 = sphi 0, %s29
      %s33 = sphi 0, %s32
      %s49 = sphi 0, %s33
      %s55 = sphi 0, %s57
      %s58 = sphi 0, %s55
      %s59 = sphi 0, %s58
      %s75 = sphi 0, %s59
      %s79 = sphi 0, %s79
      %s81 = sphi 0, %s79
      %s82 = sphi 0, %s81
      %s96 = sphi 0, %s82
      %s102 = sphi 0, %s104
      %s105 = sphi 0, %s102
      %s106 = sphi 0, %s105
      %s122 = sphi 0, %s106
    $region4: #{tpu_custom_call.1} parent=1 // loop_header_branch
      %22 = sbr.rel (%p20) target = $region8
    $region5: #{tpu_custom_call.1} parent=1 // loop_body
      %s24 = ssub.s32 %s19, 1
      %s25 = ssub.s32 %s19, 2
      %s26 = sadd.s32 %s19, 1
      %s27 = ssub.s32 %s19, %s26
      %p28 = scmp.eq.s32.totalorder %s27, 0
      %s30 = sadd.s32 %s29, 1
      %s31 = scalar_select %p28, %s29, %s30
      %p34 = pneg %p28
      %p35 = scmp.eq.s32.totalorder %s19, 1
      %p36 = por %p34, %p35
      %p37 = scmp.ne.s32.totalorder %s29, %s32
      %p38 = scmp.eq.s32.totalorder %s19, 0
      %p39 = por %p37, %p38
      %p40 = scmp.ne.s32.totalorder %s29, %s32
      %p41 = scmp.eq.s32.totalorder %s24, 1
      %p42 = por %p40, %p41
      %p43 = scmp.ne.s32.totalorder %s32, %s33
      %p44 = scmp.eq.s32.totalorder %s24, 0
      %p45 = por %p43, %p44
      %p46 = scmp.ne.s32.totalorder %s32, %s33
      %p47 = scmp.eq.s32.totalorder %s25, 1
      %p48 = por %p46, %p47
      %p50 = scmp.ne.s32.totalorder %s33, %s49
      %p51 = scmp.eq.s32.totalorder %s25, 0
      %p52 = por %p50, %p51
      %s53 = ssub.s32 %s19, %s26
      %p54 = scmp.eq.s32.totalorder %s53, 0
      %s56 = sadd.s32 %s55, 1
      %s57 = scalar_select %p54, %s55, %s56
      %p60 = pneg %p54
      %p61 = scmp.eq.s32.totalorder %s19, 1
      %p62 = por %p60, %p61
      %p63 = scmp.ne.s32.totalorder %s55, %s58
      %p64 = scmp.eq.s32.totalorder %s19, 0
      %p65 = por %p63, %p64
      %p66 = scmp.ne.s32.totalorder %s55, %s58
      %p67 = scmp.eq.s32.totalorder %s24, 1
      %p68 = por %p66, %p67
      %p69 = scmp.ne.s32.totalorder %s58, %s59
      %p70 = scmp.eq.s32.totalorder %s24, 0
      %p71 = por %p69, %p70
      %p72 = scmp.ne.s32.totalorder %s58, %s59
      %p73 = scmp.eq.s32.totalorder %s25, 1
      %p74 = por %p72, %p73
      %p76 = scmp.ne.s32.totalorder %s59, %s75
      %p77 = scmp.eq.s32.totalorder %s25, 0
      %p78 = por %p76, %p77
      %s80 = sadd.s32 %s79, 1
      %p83 = scmp.eq.s32.totalorder %s19, 1
      %p84 = scmp.ne.s32.totalorder %s79, %s81
      %p85 = scmp.eq.s32.totalorder %s19, 0
      %p86 = por %p84, %p85
      %p87 = scmp.ne.s32.totalorder %s79, %s81
      %p88 = scmp.eq.s32.totalorder %s24, 1
      %p89 = por %p87, %p88
      %p90 = scmp.ne.s32.totalorder %s81, %s82
      %p91 = scmp.eq.s32.totalorder %s24, 0
      %p92 = por %p90, %p91
      %p93 = scmp.ne.s32.totalorder %s81, %s82
      %p94 = scmp.eq.s32.totalorder %s25, 1
      %p95 = por %p93, %p94
      %p97 = scmp.ne.s32.totalorder %s82, %s96
      %p98 = scmp.eq.s32.totalorder %s25, 0
      %p99 = por %p97, %p98
      %s100 = ssub.s32 %s19, %s26
      %p101 = scmp.eq.s32.totalorder %s100, 0
      %s103 = sadd.s32 %s102, 1
      %s104 = scalar_select %p101, %s102, %s103
      %p107 = pneg %p101
      %p108 = scmp.eq.s32.totalorder %s19, 1
      %p109 = por %p107, %p108
      %p110 = scmp.ne.s32.totalorder %s102, %s105
      %p111 = scmp.eq.s32.totalorder %s19, 0
      %p112 = por %p110, %p111
      %p113 = scmp.ne.s32.totalorder %s102, %s105
      %p114 = scmp.eq.s32.totalorder %s24, 1
      %p115 = por %p113, %p114
      %p116 = scmp.ne.s32.totalorder %s105, %s106
      %p117 = scmp.eq.s32.totalorder %s24, 0
      %p118 = por %p116, %p117
      %p119 = scmp.ne.s32.totalorder %s105, %s106
      %p120 = scmp.eq.s32.totalorder %s25, 1
      %p121 = por %p119, %p120
      %p123 = scmp.ne.s32.totalorder %s106, %s122
      %p124 = scmp.eq.s32.totalorder %s25, 0
      %p125 = por %p123, %p124
      %p126 = scmp.le.s32.totalorder 1, %s19
      %p127 = scmp.lt.s32.totalorder %s19, 3
      %p128 = pnand %p126, %p127
      %p129 = pneg %p128
      // Predicated region
      $region9: #{tpu_custom_call.1} parent=5 // pred_check
        _
      $region10: #{tpu_custom_call.1} parent=5 // pred_check_branch
        %131 = sbr.rel (%p128) target = $region12
      $region11: #{tpu_custom_call.1} parent=5 // pred_region
        %s132 = ssub.s32 %s19, 1
        // Predicated region
        $region13: #{tpu_custom_call.1} parent=11 // pred_check
          %p133 = pneg %p92
        $region14: #{tpu_custom_call.1} parent=11 // pred_check_branch
          %135 = sbr.rel (%p133) target = $region16
        $region15: #{tpu_custom_call.1} parent=11 // pred_region
          %s137 = ssub.s32 16, 16
          %138 = vsyncadd [#allocation5], %s137
          %s140 = sshll.u32 %s2, 4
          %s141 = int_to_ptr.vmem [resolvable:$true] %s140
          %143 = dma.vmem_to_smem %s141, 16, [#allocation8], [#allocation5]
        $region16: #{tpu_custom_call.1} parent=11 // pred_fallthru
          _
      $region12: #{tpu_custom_call.1} parent=5 // pred_fallthru
        _
      %p144 = scmp.lt.s32.totalorder %s19, 2
      // Predicated region
      $region17: #{tpu_custom_call.1} parent=5 // pred_check
        %p145 = pneg %p144
      $region18: #{tpu_custom_call.1} parent=5 // pred_check_branch
        %147 = sbr.rel (%p145) target = $region20
      $region19: #{tpu_custom_call.1} parent=5 // pred_region
        // Predicated region
        $region21: #{tpu_custom_call.1} parent=19 // pred_check
          %p148 = pneg %p39
        $region22: #{tpu_custom_call.1} parent=19 // pred_check_branch
          %150 = sbr.rel (%p148) target = $region24
        $region23: #{tpu_custom_call.1} parent=19 // pred_region
          %s151 = sand.u32 %s29, 1
          %s152 = scalar_lea.sflag [#allocation3], %s151
          %s153 = sand.u32 %s29, 1
          %s154 = smul.addr %s153, 96
          %s155 = scalar_lea.vmem [#allocation2], %s154
          %s156 = smul.u32 2, %s19
          %s158 = ssub.s32 1536, 1536
          %159 = vsyncadd %s152, %s158
          %s160 = smul.addr %s156, 128
          %s161 = scalar_lea.hbm %s0, %s160
          %s162 = sshll.u32 %s155, 4
          %s163 = int_to_ptr.vmem [resolvable:$true] %s162
          %168 = dma.hbm_to_vmem [thread:$0]  %s161, 1536, %s163, %s152, 512, 256, 16
        $region24: #{tpu_custom_call.1} parent=19 // pred_fallthru
          _
        // Predicated region
        $region25: #{tpu_custom_call.1} parent=19 // pred_check
          %p169 = pneg %p65
        $region26: #{tpu_custom_call.1} parent=19 // pred_check_branch
          %171 = sbr.rel (%p169) target = $region28
        $region27: #{tpu_custom_call.1} parent=19 // pred_region
          %s172 = sand.u32 %s55, 1
          %s173 = scalar_lea.sflag [#allocation7], %s172
          %s174 = sand.u32 %s55, 1
          %s175 = smul.addr %s174, 16
          %s176 = scalar_lea.vmem [#allocation6], %s175
          %s177 = smul.u32 2, %s19
          %s179 = ssub.s32 256, 256
          %180 = vsyncadd %s173, %s179
          %s181 = smul.addr %s177, 128
          %s182 = scalar_lea.hbm %s1, %s181
          %s184 = sshll.u32 %s176, 4
          %s185 = int_to_ptr.vmem [resolvable:$true] %s184
          %187 = dma.hbm_to_vmem [thread:$0]  %s182, 256, %s185, %s173
        $region28: #{tpu_custom_call.1} parent=19 // pred_fallthru
          _
      $region20: #{tpu_custom_call.1} parent=5 // pred_fallthru
        _
      %p188 = scmp.le.s32.totalorder 1, %s19
      %p189 = scmp.lt.s32.totalorder %s19, 3
      %p190 = pnand %p188, %p189
      %p191 = pneg %p190
      // Predicated region
      $region29: #{tpu_custom_call.1} parent=5 // pred_check
        _
      $region30: #{tpu_custom_call.1} parent=5 // pred_check_branch
        %193 = sbr.rel (%p190) target = $region32
      $region31: #{tpu_custom_call.1} parent=5 // pred_region
        %s194 = ssub.s32 %s19, 1
        %s195 = sand.u32 %s32, 1
        %s196 = scalar_lea.sflag [#allocation3], %s195
        %s197 = sand.u32 %s32, 1
        %s198 = smul.addr %s197, 96
        %s199 = scalar_lea.vmem [#allocation2], %s198
        // Predicated region
        $region33: #{tpu_custom_call.1} parent=31 // pred_check
          %p200 = pneg %p45
        $region34: #{tpu_custom_call.1} parent=31 // pred_check_branch
          %202 = sbr.rel (%p200) target = $region36
        $region35: #{tpu_custom_call.1} parent=31 // pred_region
          %203 = dma.done %s196, 1536
        $region36: #{tpu_custom_call.1} parent=31 // pred_fallthru
          _
        %s204 = sand.u32 %s58, 1
        %s205 = scalar_lea.sflag [#allocation7], %s204
        %s206 = sand.u32 %s58, 1
        %s207 = smul.addr %s206, 16
        %s208 = scalar_lea.vmem [#allocation6], %s207
        // Predicated region
        $region37: #{tpu_custom_call.1} parent=31 // pred_check
          %p209 = pneg %p71
        $region38: #{tpu_custom_call.1} parent=31 // pred_check_branch
          %211 = sbr.rel (%p209) target = $region40
        $region39: #{tpu_custom_call.1} parent=31 // pred_region
          %212 = dma.done %s205, 256
        $region40: #{tpu_custom_call.1} parent=31 // pred_fallthru
          _
        // Predicated region
        $region41: #{tpu_custom_call.1} parent=31 // pred_check
          %p213 = pneg %p92
        $region42: #{tpu_custom_call.1} parent=31 // pred_check_branch
          %215 = sbr.rel (%p213) target = $region44
        $region43: #{tpu_custom_call.1} parent=31 // pred_region
          %216 = dma.done [#allocation5], 16
        $region44: #{tpu_custom_call.1} parent=31 // pred_fallthru
          _
        %217 = sfence
        %s218 = sand.u32 %s32, 1
        %s219 = scalar_lea.sflag [#allocation3], %s218
        %s220 = sand.u32 %s32, 1
        %s221 = smul.addr %s220, 96
        %s222 = scalar_lea.vmem [#allocation2], %s221
        %p223 = pneg %p45
        %p224 = pneg %p42
        %s225 = sand.u32 %s58, 1
        %s226 = scalar_lea.sflag [#allocation7], %s225
        %s227 = sand.u32 %s58, 1
        %s228 = smul.addr %s227, 16
        %s229 = scalar_lea.vmem [#allocation6], %s228
        %p230 = pneg %p71
        %p231 = pneg %p68
        %p232 = pneg %p92
        %p233 = pneg %p89
        %p234 = pneg %p118
        %p235 = pneg %p115
        %s236 = sand.u32 %s105, 1
        %s237 = scalar_lea.sflag [#allocation4], %s236
        %s238 = sand.u32 %s105, 1
        %s239 = smul.addr %s238, 8
        %s240 = scalar_lea.vmem [#allocation9], %s239
        %s241 = smul.u32 2, %s24
        %s242 = smul.u32 2, %s24
        %v243 = vld [vmem:[%s199] sm:$0xff]
        %v244 = vld [vmem:[%s199 + $0x8] sm:$0xff]
        %v245 = vld [vmem:[%s199 + $0x10] sm:$0xff]
        %v246 = vld [vmem:[%s199 + $0x18] sm:$0xff]
        %v247 = vld [vmem:[%s199 + $0x20] sm:$0xff]
        %v248 = vld [vmem:[%s199 + $0x28] sm:$0xff]
        %v249 = vld [vmem:[%s199 + $0x30] sm:$0xff]
        %v250 = vld [vmem:[%s199 + $0x38] sm:$0xff]
        %v251 = vld [vmem:[%s199 + $0x40] sm:$0xff]
        %v252 = vld [vmem:[%s199 + $0x48] sm:$0xff]
        %v253 = vld [vmem:[%s199 + $0x50] sm:$0xff]
        %v254 = vld [vmem:[%s199 + $0x58] sm:$0xff]
        %v255 = vld [vmem:[%s208] sm:$0xff]
        %v256 = vld [vmem:[%s208 + $0x8] sm:$0xff]
        %v257 = vmax.f32 %v243, %v247
        %v258 = vmax.f32 %v245, %v249
        %v259 = vmax.f32 %v257, %v251
        %v260 = vmax.f32 %v258, %v253
        %v261 = vmax.f32 %v259, %v260
        %v262 = vmax.f32 %v244, %v248
        %v263 = vmax.f32 %v246, %v250
        %v264 = vmax.f32 %v262, %v252
        %v265 = vmax.f32 %v263, %v254
        %v266 = vmax.f32 %v264, %v265
        %v267 = vsub.f32 %v243, %v261
        %v268 = vsub.f32 %v244, %v266
        %v269 = vsub.f32 %v245, %v261
        %v270 = vsub.f32 %v246, %v266
        %v271 = vsub.f32 %v247, %v261
        %v272 = vsub.f32 %v248, %v266
        %v273 = vsub.f32 %v249, %v261
        %v274 = vsub.f32 %v250, %v266
        %v275 = vsub.f32 %v251, %v261
        %v276 = vsub.f32 %v252, %v266
        %v277 = vsub.f32 %v253, %v261
        %v278 = vsub.f32 %v254, %v266
        %v279 = vmul.f32 %v267, 1.442695
        %v280 = vpow.pop %v279
        %v281 = vmul.f32 %v268, 1.442695
        %v282 = vpow.pop %v281
        %v283 = vmul.f32 %v269, 1.442695
        %v284 = vpow.pop %v283
        %v285 = vmul.f32 %v270, 1.442695
        %v286 = vpow.pop %v285
        %v287 = vmul.f32 %v271, 1.442695
        %v288 = vpow.pop %v287
        %v289 = vmul.f32 %v272, 1.442695
        %v290 = vpow.pop %v289
        %v291 = vmul.f32 %v273, 1.442695
        %v292 = vpow.pop %v291
        %v293 = vmul.f32 %v274, 1.442695
        %v294 = vpow.pop %v293
        %v295 = vmul.f32 %v275, 1.442695
        %v296 = vpow.pop %v295
        %v297 = vmul.f32 %v276, 1.442695
        %v298 = vpow.pop %v297
        %v299 = vmul.f32 %v277, 1.442695
        %v300 = vpow.pop %v299
        %v301 = vmul.f32 %v278, 1.442695
        %v302 = vpow.pop %v301
        %v303 = vadd.f32 %v280, %v284
        %v304 = vadd.f32 %v303, %v288
        %v305 = vadd.f32 %v304, %v292
        %v306 = vadd.f32 %v305, %v296
        %v307 = vadd.f32 %v306, %v300
        %v308 = vadd.f32 %v282, %v286
        %v309 = vadd.f32 %v308, %v290
        %v310 = vadd.f32 %v309, %v294
        %v311 = vadd.f32 %v310, %v298
        %v312 = vadd.f32 %v311, %v302
        %vm313 = vcmp.eq.s32.totalorder %v255, 0
        %vm314 = vcmp.eq.s32.totalorder %v256, 0
        %vm315 = vcmp.eq.s32.totalorder %v255, 1
        %vm316 = vcmp.eq.s32.totalorder %v256, 1
        %vm317 = vcmp.eq.s32.totalorder %v255, 2
        %vm318 = vcmp.eq.s32.totalorder %v256, 2
        %vm319 = vcmp.eq.s32.totalorder %v255, 3
        %vm320 = vcmp.eq.s32.totalorder %v256, 3
        %vm321 = vcmp.eq.s32.totalorder %v255, 4
        %vm322 = vcmp.eq.s32.totalorder %v256, 4
        %vm323 = vcmp.eq.s32.totalorder %v255, 5
        %vm324 = vcmp.eq.s32.totalorder %v256, 5
        %v325 = vsel %vm313, 1, 0
        %v326 = vsel %vm314, 1, 0
        %v327 = vsel %vm315, 1, 0
        %v328 = vsel %vm316, 1, 0
        %v329 = vsel %vm317, 1, 0
        %v330 = vsel %vm318, 1, 0
        %v331 = vsel %vm319, 1, 0
        %v332 = vsel %vm320, 1, 0
        %v333 = vsel %vm321, 1, 0
        %v334 = vsel %vm322, 1, 0
        %v335 = vsel %vm323, 1, 0
        %v336 = vsel %vm324, 1, 0
        %v337 = vcvt.s32.f32 %v325
        %v338 = vcvt.s32.f32 %v326
        %v339 = vcvt.s32.f32 %v327
        %v340 = vcvt.s32.f32 %v328
        %v341 = vcvt.s32.f32 %v329
        %v342 = vcvt.s32.f32 %v330
        %v343 = vcvt.s32.f32 %v331
        %v344 = vcvt.s32.f32 %v332
        %v345 = vcvt.s32.f32 %v333
        %v346 = vcvt.s32.f32 %v334
        %v347 = vcvt.s32.f32 %v335
        %v348 = vcvt.s32.f32 %v336
        %v349 = vmul.f32 %v337, %v243
        %v350 = vmul.f32 %v338, %v244
        %v351 = vmul.f32 %v339, %v245
        %v352 = vmul.f32 %v340, %v246
        %v353 = vmul.f32 %v341, %v247
        %v354 = vmul.f32 %v342, %v248
        %v355 = vmul.f32 %v343, %v249
        %v356 = vmul.f32 %v344, %v250
        %v357 = vmul.f32 %v345, %v251
        %v358 = vmul.f32 %v346, %v252
        %v359 = vmul.f32 %v347, %v253
        %v360 = vmul.f32 %v348, %v254
        %v361 = vadd.f32 %v349, %v351
        %v362 = vadd.f32 %v361, %v353
        %v363 = vadd.f32 %v362, %v355
        %v364 = vadd.f32 %v363, %v357
        %v365 = vadd.f32 %v364, %v359
        %v366 = vadd.f32 %v350, %v352
        %v367 = vadd.f32 %v366, %v354
        %v368 = vadd.f32 %v367, %v356
        %v369 = vadd.f32 %v368, %v358
        %v370 = vadd.f32 %v369, %v360
        %v371 = vmul.f32 %v337, %v280
        %v372 = vmul.f32 %v338, %v282
        %v373 = vmul.f32 %v339, %v284
        %v374 = vmul.f32 %v340, %v286
        %v375 = vmul.f32 %v341, %v288
        %v376 = vmul.f32 %v342, %v290
        %v377 = vmul.f32 %v343, %v292
        %v378 = vmul.f32 %v344, %v294
        %v379 = vmul.f32 %v345, %v296
        %v380 = vmul.f32 %v346, %v298
        %v381 = vmul.f32 %v347, %v300
        %v382 = vmul.f32 %v348, %v302
        %v383 = vadd.f32 %v371, %v373
        %v384 = vadd.f32 %v383, %v375
        %v385 = vadd.f32 %v384, %v377
        %v386 = vadd.f32 %v385, %v379
        %v387 = vadd.f32 %v386, %v381
        %v388 = vadd.f32 %v372, %v374
        %v389 = vadd.f32 %v388, %v376
        %v390 = vadd.f32 %v389, %v378
        %v391 = vadd.f32 %v390, %v380
        %v392 = vadd.f32 %v391, %v382
        %v393 = vlog2.pop %v307
        %v394 = vmul.f32 %v393, 0.6931472
        %v395 = vlog2.pop %v312
        %v396 = vmul.f32 %v395, 0.6931472
        %v397 = vadd.f32 %v261, %v394
        %v398 = vadd.f32 %v266, %v396
        %v399 = vsub.f32 %v397, %v365
        %v400 = vsub.f32 %v398, %v370
        %v401 = vrcp.pop %v307
        %v402 = vmul.f32 %v387, %v401
        %v403 = vrcp.pop %v312
        %v404 = vmul.f32 %v392, %v403
        %s405 = sld [smem:[#allocation8]]
        %v406 = vstv %s405
        %v407 = vmul.f32 %v337, %v406
        %v408 = vmul.f32 %v338, %v406
        %s409 = sld [smem:[#allocation8 + $0x1]]
        %v410 = vstv %s409
        %v411 = vmul.f32 %v339, %v410
        %v412 = vmul.f32 %v340, %v410
        %v413 = vadd.f32 %v407, %v411
        %v414 = vadd.f32 %v408, %v412
        %s415 = sld [smem:[#allocation8 + $0x2]]
        %v416 = vstv %s415
        %v417 = vmul.f32 %v341, %v416
        %v418 = vmul.f32 %v342, %v416
        %v419 = vadd.f32 %v413, %v417
        %v420 = vadd.f32 %v414, %v418
        %s421 = sld [smem:[#allocation8 + $0x3]]
        %v422 = vstv %s421
        %v423 = vmul.f32 %v343, %v422
        %v424 = vmul.f32 %v344, %v422
        %v425 = vadd.f32 %v419, %v423
        %v426 = vadd.f32 %v420, %v424
        %s427 = sld [smem:[#allocation8 + $0x4]]
        %v428 = vstv %s427
        %v429 = vmul.f32 %v345, %v428
        %v430 = vmul.f32 %v346, %v428
        %v431 = vadd.f32 %v425, %v429
        %v432 = vadd.f32 %v426, %v430
        %s433 = sld [smem:[#allocation8 + $0x5]]
        %v434 = vstv %s433
        %v435 = vmul.f32 %v347, %v434
        %v436 = vmul.f32 %v348, %v434
        %v437 = vadd.f32 %v431, %v435
        %v438 = vadd.f32 %v432, %v436
        %v439 = vsub.f32 1.0, %v402
        %v440 = vsub.f32 1.0, %v404
        %v441 = vmax.f32 %v439, 0.0
        %v442 = vmax.f32 %v440, 0.0
        %v443 = vmul.f32 %v441, %v441
        %v444 = vmul.f32 %v442, %v442
        %v445 = vmul.f32 %v437, %v443
        %v446 = vmul.f32 %v438, %v444
        %v447 = vmul.f32 %v445, %v399
        %v448 = vmul.f32 %v446, %v400
        %v449 = vlaneseq
        %v450 = vshrl.u32 %v449, 7
        %v451 = vlaneseq
        %v452 = vand.u32 %v451, 127
        %v453 = vadd.s32 %v452, 128
        %s454 = smul.u32 %s24, 256
        %v455 = vstv %s454
        %v456 = vadd.s32 %v455, %v452
        %v457 = vadd.s32 %v455, %v453
        %v458 = vmul.u32 %v456, 8
        %v459 = vmul.u32 %v457, 8
        %v460 = vadd.s32 %v458, %v450
        %v461 = vadd.s32 %v459, %v450
        %vm462 = vcmp.lt.s32.totalorder %v460, 2500
        %vm463 = vcmp.lt.s32.totalorder %v461, 2500
        %v464 = vsel %vm462, %v447, 0.0
        %v465 = vsel %vm463, %v448, 0.0
        %v466 = vadd.f32 %v464, %v465
        %467 = vst [vmem:[%s240] sm:$0xff] %v466
        %s468 = sand.u32 %s105, 1
        %s469 = scalar_lea.sflag [#allocation4], %s468
        %s470 = sand.u32 %s105, 1
        %s471 = smul.addr %s470, 8
        %s472 = scalar_lea.vmem [#allocation9], %s471
        // Predicated region
        $region45: #{tpu_custom_call.1} parent=31 // pred_check
          %p473 = pneg %p115
        $region46: #{tpu_custom_call.1} parent=31 // pred_check_branch
          %475 = sbr.rel (%p473) target = $region48
        $region47: #{tpu_custom_call.1} parent=31 // pred_region
          %s477 = ssub.s32 128, 128
          %478 = vsyncadd %s469, %s477
          %s479 = smul.addr %s24, 128
          %s480 = scalar_lea.hbm %s3, %s479
          %s482 = sshll.u32 %s472, 4
          %s483 = int_to_ptr.vmem [resolvable:$true] %s482
          %485 = dma.vmem_to_hbm [thread:$0]  %s483, 128, %s480, %s469
        $region48: #{tpu_custom_call.1} parent=31 // pred_fallthru
          _
      $region32: #{tpu_custom_call.1} parent=5 // pred_fallthru
        _
      %p486 = scmp.le.s32.totalorder 2, %s19
      // Predicated region
      $region49: #{tpu_custom_call.1} parent=5 // pred_check
        %p487 = pneg %p486
      $region50: #{tpu_custom_call.1} parent=5 // pred_check_branch
        %489 = sbr.rel (%p487) target = $region52
      $region51: #{tpu_custom_call.1} parent=5 // pred_region
        %s490 = ssub.s32 %s19, 2
        // Predicated region
        $region53: #{tpu_custom_call.1} parent=51 // pred_check
          %p491 = pneg %p121
        $region54: #{tpu_custom_call.1} parent=51 // pred_check_branch
          %493 = sbr.rel (%p491) target = $region56
        $region55: #{tpu_custom_call.1} parent=51 // pred_region
          %s494 = sand.u32 %s106, 1
          %s495 = scalar_lea.sflag [#allocation4], %s494
          %s496 = sand.u32 %s106, 1
          %s497 = smul.addr %s496, 8
          %s498 = scalar_lea.vmem [#allocation9], %s497
          %499 = dma.done %s495, 128
        $region56: #{tpu_custom_call.1} parent=51 // pred_fallthru
          _
      $region52: #{tpu_custom_call.1} parent=5 // pred_fallthru
        _
    $region6: #{tpu_custom_call.1} parent=1 // loop_footer
      %s23 = sadd.s32 1, %s19
    $region7: #{tpu_custom_call.1} parent=1 // loop_footer_branch
      %18 = sbr.rel target = $region3
    $region8: #{tpu_custom_call.1} parent=1 // loop_exit
      _
    %500 = vsyncpa [#allocation3], 1
    %s501 = scalar_lea.sflag [#allocation3], 1
    %502 = vsyncpa %s501, 1
    %503 = vsyncpa [#allocation7], 1
    %s504 = scalar_lea.sflag [#allocation7], 1
    %505 = vsyncpa %s504, 1
    %506 = vsyncpa [#allocation4], 1
    %s507 = scalar_lea.sflag [#allocation4], 1
    %508 = vsyncpa %s507, 1
    %509 = vsyncpa [#allocation5], 1
    %s510 = scalar_lea.sflag [#allocation5], 1
    %511 = vsyncpa %s510, 1

</llo_original>
